<compile_context>
chip_gen: v6e
topology: v6e:2x2x1
jax: 0.10.0
libtpu: 0.0.40
codegen_flags: <defaults>
</compile_context>

<pallas_src>
import numpy as np
import jax
import jax.numpy as jnp
from jax.experimental import pallas as pl
from jax.experimental.pallas import tpu as pltpu

BN_EPS = 1e-5
_GELU_C = 0.7978845608028654  # sqrt(2/pi)


def _gelu(x):
    # tanh-form GELU; the tanh runs on the EUP slot (free relative to VALU).
    return 0.5 * x * (1.0 + jnp.tanh(_GELU_C * (x + 0.044715 * (x * x * x))))


def _make_kernel(H, W, identity_shortcut):
    HW = H * W

    def _compute(x_ref, w1_ref, b1_ref, w2_ref, b2_ref, o_ref, ws_ref, bs_ref):
        # Edge masks, computed once and reused by both convs.  They zero the
        # taps whose source pixel falls outside the image (SAME padding).
        pos = jax.lax.broadcasted_iota(jnp.int32, (1, HW), 1)   # flattened index
        col = pos % W                                           # column within row
        m_left = (col != 0).astype(jnp.float32)          # dx = -1 invalid at col 0
        m_right = (col != (W - 1)).astype(jnp.float32)   # dx = +1 invalid at col W-1
        m_top = (pos >= W).astype(jnp.float32)           # dy = -1 invalid at row 0
        m_bot = (pos < (HW - W)).astype(jnp.float32)     # dy = +1 invalid at row H-1

        def conv3x3(a, w_ref, b_ref):
            # a: (C, HW) f32.  Build the (9*C, HW) im2col operand with XLU
            # rolls + masks, then a single wide-K bf16 MXU matmul.
            am = pltpu.roll(a, 1, axis=1) * m_left            # dx = -1  (kx = 0)
            ap = pltpu.roll(a, HW - 1, axis=1) * m_right      # dx = +1  (kx = 2)
            acat = jnp.concatenate([am, a, ap], axis=0)       # kx = 0, 1, 2
            up = pltpu.roll(acat, W, axis=1) * m_top          # dy = -1  (ky = 0)
            dn = pltpu.roll(acat, HW - W, axis=1) * m_bot     # dy = +1  (ky = 2)
            imcol = jnp.concatenate([up, acat, dn], axis=0)   # (9*C, HW), ky major
            return (jnp.dot(w_ref[...], imcol.astype(jnp.bfloat16),
                            preferred_element_type=jnp.float32)
                    + b_ref[...])                             # (Cout, HW) f32

        x = x_ref[0]                                    # (Cin, HW) f32
        h = _gelu(conv3x3(x, w1_ref, b1_ref))           # conv1 + folded bn1 + gelu
        h = conv3x3(h, w2_ref, b2_ref)                  # conv2 + folded bn2
        if identity_shortcut:
            sc = x                                      # static specialization
        else:
            sc = (jnp.dot(ws_ref[...], x.astype(jnp.bfloat16),
                          preferred_element_type=jnp.float32)
                  + bs_ref[...])                        # 1x1 conv + folded bn
        o_ref[0] = _gelu(h + sc)

    if identity_shortcut:
        def kernel(x_ref, w1_ref, b1_ref, w2_ref, b2_ref, o_ref):
            _compute(x_ref, w1_ref, b1_ref, w2_ref, b2_ref, o_ref, None, None)
    else:
        def kernel(x_ref, w1_ref, b1_ref, w2_ref, b2_ref, ws_ref, bs_ref, o_ref):
            _compute(x_ref, w1_ref, b1_ref, w2_ref, b2_ref, o_ref, ws_ref, bs_ref)
    return kernel


def _fold_bn(gamma, beta, mean, var):
    scale = gamma / jnp.sqrt(var + BN_EPS)
    bias = beta - mean * scale
    return scale, bias


def prepare_kernel_params(p):
    """Fold eval-mode BatchNorm into the conv / shortcut weights (one-time,
    host/XLA side) and lay weights out as (Cout, K) bf16 for the kernel."""
    s1, b1 = _fold_bn(*p["bn1"])
    s2, b2 = _fold_bn(*p["bn2"])
    cout = p["w1"].shape[-1]
    # (3,3,Cin,Cout) -> (Cout, ky, kx, cin) -> (Cout, 9*Cin); matches im2col order.
    W1 = jnp.transpose(p["w1"] * s1, (3, 0, 1, 2)).reshape(cout, -1)
    W2 = jnp.transpose(p["w2"] * s2, (3, 0, 1, 2)).reshape(cout, -1)
    kp = {"W1": W1.astype(jnp.bfloat16), "b1": b1.reshape(cout, 1),
          "W2": W2.astype(jnp.bfloat16), "b2": b2.reshape(cout, 1)}
    if p["ws"] is not None:
        ss, bs = _fold_bn(*p["bns"])
        kp["Ws"] = (p["ws"].T * ss[:, None]).astype(jnp.bfloat16)   # (Cout, Cin)
        kp["bs"] = bs.reshape(cout, 1)
    return kp


def residual_block_forward(x_nchw, raw_params):
    """x_nchw: (N, Cin, H, W) float32 -> (N, Cout, H, W) float32."""
    N, Cin, H, W = x_nchw.shape
    kp = prepare_kernel_params(raw_params)
    Cout = kp["W1"].shape[0]
    HW = H * W
    identity = "Ws" not in kp

    xf = x_nchw.reshape(N, Cin, HW)        # flattened NCHW, no transpose needed

    def full(arr):
        shp = arr.shape
        return pl.BlockSpec(shp, lambda n, _r=len(shp): (0,) * _r)

    args = [xf, kp["W1"], kp["b1"], kp["W2"], kp["b2"]]
    in_specs = [pl.BlockSpec((1, Cin, HW), lambda n: (n, 0, 0)),
                full(kp["W1"]), full(kp["b1"]),
                full(kp["W2"]), full(kp["b2"])]
    if not identity:
        args += [kp["Ws"], kp["bs"]]
        in_specs += [full(kp["Ws"]), full(kp["bs"])]

    out = pl.pallas_call(
        _make_kernel(H, W, identity),
        out_shape=jax.ShapeDtypeStruct((N, Cout, HW), jnp.float32),
        grid=(N,),
        in_specs=in_specs,
        out_specs=pl.BlockSpec((1, Cout, HW), lambda n: (n, 0, 0)),
        compiler_params=pltpu.CompilerParams(
            dimension_semantics=("parallel",),
            vmem_limit_bytes=32 * 1024 * 1024),
    )(*args)

    return out.reshape(N, Cout, H, W)


def init_params(key, Cin, Cout, stride=1):
    """Deterministic synthetic parameters (HWIO conv weights, raw BN stats)."""
    ks = jax.random.split(key, 6)

    def bn_params(k, C):
        kg, kb, km, kv = jax.random.split(k, 4)
        return (jax.random.uniform(kg, (C,), jnp.float32, 0.8, 1.2),   # gamma
                jax.random.normal(kb, (C,), jnp.float32) * 0.1,        # beta
                jax.random.normal(km, (C,), jnp.float32) * 0.1,        # running mean
                jax.random.uniform(kv, (C,), jnp.float32, 0.5, 1.5))   # running var

    p = dict(
        w1=jax.random.normal(ks[0], (3, 3, Cin, Cout), jnp.float32) * 0.1,
        bn1=bn_params(ks[1], Cout),
        w2=jax.random.normal(ks[2], (3, 3, Cout, Cout), jnp.float32) * 0.1,
        bn2=bn_params(ks[3], Cout),
        ws=None, bns=None)
    if stride != 1 or Cin != Cout:
        p["ws"] = jax.random.normal(ks[4], (Cin, Cout), jnp.float32) * 0.1
        p["bns"] = bn_params(ks[5], Cout)
    return p


def _bn_eval(x, gamma, beta, mean, var):
    return (x - mean) / jnp.sqrt(var + BN_EPS) * gamma + beta


def reference_forward(x_nchw, p):
    """Pure-JAX reference (same math as the PyTorch module in eval mode)."""
    x = jnp.transpose(x_nchw, (0, 2, 3, 1))
    conv = lambda a, w: jax.lax.conv_general_dilated(
        a, w, (1, 1), "SAME", dimension_numbers=("NHWC", "HWIO", "NHWC"))
    gelu = lambda a: 0.5 * a * (1.0 + jax.scipy.special.erf(a / jnp.sqrt(2.0)))
    h = gelu(_bn_eval(conv(x, p["w1"]), *p["bn1"]))
    h = _bn_eval(conv(h, p["w2"]), *p["bn2"])
    if p["ws"] is not None:
        sc = _bn_eval(jnp.einsum("nhwc,cd->nhwd", x, p["ws"]), *p["bns"])
    else:
        sc = x
    return jnp.transpose(gelu(h + sc), (0, 3, 1, 2))


if __name__ == "__main__":
    key = jax.random.PRNGKey(0)
    kx1, kp1, kx2, kp2 = jax.random.split(key, 4)

    # Case 1: Cin != Cout -> projection shortcut (1x1 conv + BN).
    N, Cin, Cout, H, W = 2, 4, 8, 16, 16
    x1 = jax.random.normal(kx1, (N, Cin, H, W), jnp.float32)
    p1 = init_params(kp1, Cin, Cout, stride=1)
    out1 = jax.block_until_ready(residual_block_forward(x1, p1))
    ref1 = jax.block_until_ready(reference_forward(x1, p1))
    assert out1.shape == (N, Cout, H, W), out1.shape
    err1 = float(np.max(np.abs(np.asarray(out1) - np.asarray(ref1))))
    assert np.allclose(np.asarray(out1), np.asarray(ref1), rtol=2e-2, atol=2e-2), err1

    # Case 2: Cin == Cout -> identity shortcut (statically specialized, no matmul).
    C = 8
    x2 = jax.random.normal(kx2, (N, C, H, W), jnp.float32)
    p2 = init_params(kp2, C, C, stride=1)
    out2 = jax.block_until_ready(residual_block_forward(x2, p2))
    ref2 = jax.block_until_ready(reference_forward(x2, p2))
    assert out2.shape == (N, C, H, W), out2.shape
    err2 = float(np.max(np.abs(np.asarray(out2) - np.asarray(ref2))))
    assert np.allclose(np.asarray(out2), np.asarray(ref2), rtol=2e-2, atol=2e-2), err2

    print("KERNEL_OK")
</pallas_src>

<mosaic_0001>
module attributes {stable_mosaic.version = 11 : i64} {
  func.func @kernel(%arg0: i32, %arg1: memref<1x4x256xf32, #tpu.memory_space<vmem>>, %arg2: memref<8x36xbf16, #tpu.memory_space<vmem>>, %arg3: memref<8x1xf32, #tpu.memory_space<vmem>>, %arg4: memref<8x72xbf16, #tpu.memory_space<vmem>>, %arg5: memref<8x1xf32, #tpu.memory_space<vmem>>, %arg6: memref<8x4xbf16, #tpu.memory_space<vmem>>, %arg7: memref<8x1xf32, #tpu.memory_space<vmem>>, %arg8: memref<1x8x256xf32, #tpu.memory_space<vmem>>) attributes {dimension_semantics = [#tpu.dimension_semantics<parallel>], iteration_bounds = array<i64: 2>, scalar_prefetch = 0 : i64, scratch_operands = 0 : i64, tpu.core_type = #tpu.core_type<tc>, window_params = [{transform_indices = @transform_0, window_bounds = array<i64: 1, 4, 256>}, {pipeline_mode = #tpu.pipeline_mode<synchronous>, transform_indices = @transform_1, window_bounds = array<i64: 8, 36>}, {pipeline_mode = #tpu.pipeline_mode<synchronous>, transform_indices = @transform_2, window_bounds = array<i64: 8, 1>}, {pipeline_mode = #tpu.pipeline_mode<synchronous>, transform_indices = @transform_3, window_bounds = array<i64: 8, 72>}, {pipeline_mode = #tpu.pipeline_mode<synchronous>, transform_indices = @transform_4, window_bounds = array<i64: 8, 1>}, {pipeline_mode = #tpu.pipeline_mode<synchronous>, transform_indices = @transform_5, window_bounds = array<i64: 8, 4>}, {pipeline_mode = #tpu.pipeline_mode<synchronous>, transform_indices = @transform_6, window_bounds = array<i64: 8, 1>}, {transform_indices = @transform_7, window_bounds = array<i64: 1, 8, 256>}]} {
    %0 = tpu.iota {dimensions = array<i32: 1>} : vector<1x256xi32>
    %c16_i32 = arith.constant 16 : i32
    %c0_i32 = arith.constant 0 : i32
    %1 = arith.cmpi eq, %c16_i32, %c0_i32 : i32
    %c1_i32 = arith.constant 1 : i32
    %2 = arith.select %1, %c1_i32, %c16_i32 : i32
    %3 = vector.broadcast %2 : i32 to vector<1x256xi32>
    %4 = arith.remsi %0, %3 : vector<1x256xi32>
    %c0_i32_0 = arith.constant 0 : i32
    %5 = vector.broadcast %c0_i32_0 : i32 to vector<1x256xi32>
    %6 = arith.cmpi ne, %4, %5 : vector<1x256xi32>
    %c0_i32_1 = arith.constant 0 : i32
    %7 = vector.broadcast %c0_i32_1 : i32 to vector<1x256xi32>
    %8 = arith.cmpi slt, %4, %7 : vector<1x256xi32>
    %c0_i32_2 = arith.constant 0 : i32
    %9 = arith.cmpi slt, %2, %c0_i32_2 : i32
    %10 = vector.broadcast %9 : i1 to vector<1x256xi1>
    %11 = vector.broadcast %10 : vector<1x256xi1> to vector<1x256xi1>
    %12 = arith.xori %8, %11 : vector<1x256xi1>
    %13 = arith.andi %12, %6 : vector<1x256xi1>
    %14 = vector.broadcast %2 : i32 to vector<1x256xi32>
    %15 = arith.addi %4, %14 : vector<1x256xi32>
    %16 = arith.select %13, %15, %4 : vector<1x256xi1>, vector<1x256xi32>
    %c0_i32_3 = arith.constant 0 : i32
    %17 = vector.broadcast %c0_i32_3 : i32 to vector<1x256xi32>
    %18 = arith.cmpi ne, %16, %17 : vector<1x256xi32>
    %19 = arith.extui %18 : vector<1x256xi1> to vector<1x256xi32>
    %20 = arith.sitofp %19 : vector<1x256xi32> to vector<1x256xf32>
    %c15_i32 = arith.constant 15 : i32
    %21 = vector.broadcast %c15_i32 : i32 to vector<1x256xi32>
    %22 = arith.cmpi ne, %16, %21 : vector<1x256xi32>
    %23 = arith.extui %22 : vector<1x256xi1> to vector<1x256xi32>
    %24 = arith.sitofp %23 : vector<1x256xi32> to vector<1x256xf32>
    %c16_i32_4 = arith.constant 16 : i32
    %25 = vector.broadcast %c16_i32_4 : i32 to vector<1x256xi32>
    %26 = arith.cmpi sge, %0, %25 : vector<1x256xi32>
    %27 = arith.extui %26 : vector<1x256xi1> to vector<1x256xi32>
    %28 = arith.sitofp %27 : vector<1x256xi32> to vector<1x256xf32>
    %c240_i32 = arith.constant 240 : i32
    %29 = vector.broadcast %c240_i32 : i32 to vector<1x256xi32>
    %30 = arith.cmpi slt, %0, %29 : vector<1x256xi32>
    %31 = arith.extui %30 : vector<1x256xi1> to vector<1x256xi32>
    %32 = arith.sitofp %31 : vector<1x256xi32> to vector<1x256xf32>
    %c0 = arith.constant 0 : index
    %c0_5 = arith.constant 0 : index
    %c0_6 = arith.constant 0 : index
    %33 = vector.load %arg1[%c0, %c0_5, %c0_6] : memref<1x4x256xf32, #tpu.memory_space<vmem>>, vector<1x4x256xf32>
    %34 = vector.shape_cast %33 : vector<1x4x256xf32> to vector<4x256xf32>
    %c1_i32_7 = arith.constant 1 : i32
    %35 = tpu.dynamic_rotate %34 by %c1_i32_7 dim 1 : vector<4x256xf32>, i32 -> vector<4x256xf32>
    %36 = vector.broadcast %20 : vector<1x256xf32> to vector<4x256xf32>
    %37 = arith.mulf %35, %36 : vector<4x256xf32>
    %c255_i32 = arith.constant 255 : i32
    %38 = tpu.dynamic_rotate %34 by %c255_i32 dim 1 : vector<4x256xf32>, i32 -> vector<4x256xf32>
    %39 = vector.broadcast %24 : vector<1x256xf32> to vector<4x256xf32>
    %40 = arith.mulf %38, %39 : vector<4x256xf32>
    %41 = tpu.concatenate %37, %34, %40 in 0 : vector<4x256xf32>, vector<4x256xf32>, vector<4x256xf32> -> vector<12x256xf32>
    %c16_i32_8 = arith.constant 16 : i32
    %42 = tpu.dynamic_rotate %41 by %c16_i32_8 dim 1 : vector<12x256xf32>, i32 -> vector<12x256xf32>
    %43 = vector.broadcast %28 : vector<1x256xf32> to vector<12x256xf32>
    %44 = arith.mulf %42, %43 : vector<12x256xf32>
    %c240_i32_9 = arith.constant 240 : i32
    %45 = tpu.dynamic_rotate %41 by %c240_i32_9 dim 1 : vector<12x256xf32>, i32 -> vector<12x256xf32>
    %46 = vector.broadcast %32 : vector<1x256xf32> to vector<12x256xf32>
    %47 = arith.mulf %45, %46 : vector<12x256xf32>
    %48 = tpu.concatenate %44, %41, %47 in 0 : vector<12x256xf32>, vector<12x256xf32>, vector<12x256xf32> -> vector<36x256xf32>
    %c0_10 = arith.constant 0 : index
    %c0_11 = arith.constant 0 : index
    %49 = vector.load %arg2[%c0_10, %c0_11] : memref<8x36xbf16, #tpu.memory_space<vmem>>, vector<8x36xbf16>
    %50 = arith.truncf %48 : vector<36x256xf32> to vector<36x256xbf16>
    %cst = arith.constant dense<0.000000e+00> : vector<8x256xf32>
    %51 = tpu.matmul %49, %50, %cst {dimension_numbers = #tpu.dot_dimension_numbers<[1], [0], [0], [1], [0, 0, 1, 1], [], []>} : vector<8x36xbf16>, vector<36x256xbf16>, vector<8x256xf32> -> vector<8x256xf32>
    %c0_12 = arith.constant 0 : index
    %c0_13 = arith.constant 0 : index
    %52 = vector.load %arg3[%c0_12, %c0_13] : memref<8x1xf32, #tpu.memory_space<vmem>>, vector<8x1xf32>
    %53 = vector.broadcast %52 : vector<8x1xf32> to vector<8x256xf32>
    %54 = arith.addf %51, %53 : vector<8x256xf32>
    %cst_14 = arith.constant 5.000000e-01 : f32
    %55 = vector.broadcast %cst_14 : f32 to vector<8x256xf32>
    %56 = arith.mulf %55, %54 : vector<8x256xf32>
    %57 = arith.mulf %54, %54 : vector<8x256xf32>
    %58 = arith.mulf %57, %54 : vector<8x256xf32>
    %cst_15 = arith.constant 4.471500e-02 : f32
    %59 = vector.broadcast %cst_15 : f32 to vector<8x256xf32>
    %60 = arith.mulf %59, %58 : vector<8x256xf32>
    %61 = arith.addf %54, %60 : vector<8x256xf32>
    %cst_16 = arith.constant 0.797884583 : f32
    %62 = vector.broadcast %cst_16 : f32 to vector<8x256xf32>
    %63 = arith.mulf %62, %61 : vector<8x256xf32>
    %64 = math.tanh %63 : vector<8x256xf32>
    %cst_17 = arith.constant 1.000000e+00 : f32
    %65 = vector.broadcast %cst_17 : f32 to vector<8x256xf32>
    %66 = arith.addf %65, %64 : vector<8x256xf32>
    %67 = arith.mulf %56, %66 : vector<8x256xf32>
    %c1_i32_18 = arith.constant 1 : i32
    %68 = tpu.dynamic_rotate %67 by %c1_i32_18 dim 1 : vector<8x256xf32>, i32 -> vector<8x256xf32>
    %69 = vector.broadcast %20 : vector<1x256xf32> to vector<8x256xf32>
    %70 = arith.mulf %68, %69 : vector<8x256xf32>
    %c255_i32_19 = arith.constant 255 : i32
    %71 = tpu.dynamic_rotate %67 by %c255_i32_19 dim 1 : vector<8x256xf32>, i32 -> vector<8x256xf32>
    %72 = vector.broadcast %24 : vector<1x256xf32> to vector<8x256xf32>
    %73 = arith.mulf %71, %72 : vector<8x256xf32>
    %74 = tpu.concatenate %70, %67, %73 in 0 : vector<8x256xf32>, vector<8x256xf32>, vector<8x256xf32> -> vector<24x256xf32>
    %c16_i32_20 = arith.constant 16 : i32
    %75 = tpu.dynamic_rotate %74 by %c16_i32_20 dim 1 : vector<24x256xf32>, i32 -> vector<24x256xf32>
    %76 = vector.broadcast %28 : vector<1x256xf32> to vector<24x256xf32>
    %77 = arith.mulf %75, %76 : vector<24x256xf32>
    %c240_i32_21 = arith.constant 240 : i32
    %78 = tpu.dynamic_rotate %74 by %c240_i32_21 dim 1 : vector<24x256xf32>, i32 -> vector<24x256xf32>
    %79 = vector.broadcast %32 : vector<1x256xf32> to vector<24x256xf32>
    %80 = arith.mulf %78, %79 : vector<24x256xf32>
    %81 = tpu.concatenate %77, %74, %80 in 0 : vector<24x256xf32>, vector<24x256xf32>, vector<24x256xf32> -> vector<72x256xf32>
    %c0_22 = arith.constant 0 : index
    %c0_23 = arith.constant 0 : index
    %82 = vector.load %arg4[%c0_22, %c0_23] : memref<8x72xbf16, #tpu.memory_space<vmem>>, vector<8x72xbf16>
    %83 = arith.truncf %81 : vector<72x256xf32> to vector<72x256xbf16>
    %cst_24 = arith.constant dense<0.000000e+00> : vector<8x256xf32>
    %84 = tpu.matmul %82, %83, %cst_24 {dimension_numbers = #tpu.dot_dimension_numbers<[1], [0], [0], [1], [0, 0, 1, 1], [], []>} : vector<8x72xbf16>, vector<72x256xbf16>, vector<8x256xf32> -> vector<8x256xf32>
    %c0_25 = arith.constant 0 : index
    %c0_26 = arith.constant 0 : index
    %85 = vector.load %arg5[%c0_25, %c0_26] : memref<8x1xf32, #tpu.memory_space<vmem>>, vector<8x1xf32>
    %86 = vector.broadcast %85 : vector<8x1xf32> to vector<8x256xf32>
    %87 = arith.addf %84, %86 : vector<8x256xf32>
    %c0_27 = arith.constant 0 : index
    %c0_28 = arith.constant 0 : index
    %88 = vector.load %arg6[%c0_27, %c0_28] : memref<8x4xbf16, #tpu.memory_space<vmem>>, vector<8x4xbf16>
    %89 = arith.truncf %34 : vector<4x256xf32> to vector<4x256xbf16>
    %cst_29 = arith.constant dense<0.000000e+00> : vector<8x256xf32>
    %90 = tpu.matmul %88, %89, %cst_29 {dimension_numbers = #tpu.dot_dimension_numbers<[1], [0], [0], [1], [0, 0, 1, 1], [], []>} : vector<8x4xbf16>, vector<4x256xbf16>, vector<8x256xf32> -> vector<8x256xf32>
    %c0_30 = arith.constant 0 : index
    %c0_31 = arith.constant 0 : index
    %91 = vector.load %arg7[%c0_30, %c0_31] : memref<8x1xf32, #tpu.memory_space<vmem>>, vector<8x1xf32>
    %92 = vector.broadcast %91 : vector<8x1xf32> to vector<8x256xf32>
    %93 = arith.addf %90, %92 : vector<8x256xf32>
    %94 = arith.addf %87, %93 : vector<8x256xf32>
    %cst_32 = arith.constant 5.000000e-01 : f32
    %95 = vector.broadcast %cst_32 : f32 to vector<8x256xf32>
    %96 = arith.mulf %95, %94 : vector<8x256xf32>
    %97 = arith.mulf %94, %94 : vector<8x256xf32>
    %98 = arith.mulf %97, %94 : vector<8x256xf32>
    %cst_33 = arith.constant 4.471500e-02 : f32
    %99 = vector.broadcast %cst_33 : f32 to vector<8x256xf32>
    %100 = arith.mulf %99, %98 : vector<8x256xf32>
    %101 = arith.addf %94, %100 : vector<8x256xf32>
    %cst_34 = arith.constant 0.797884583 : f32
    %102 = vector.broadcast %cst_34 : f32 to vector<8x256xf32>
    %103 = arith.mulf %102, %101 : vector<8x256xf32>
    %104 = math.tanh %103 : vector<8x256xf32>
    %cst_35 = arith.constant 1.000000e+00 : f32
    %105 = vector.broadcast %cst_35 : f32 to vector<8x256xf32>
    %106 = arith.addf %105, %104 : vector<8x256xf32>
    %107 = arith.mulf %96, %106 : vector<8x256xf32>
    %c0_36 = arith.constant 0 : index
    %c0_37 = arith.constant 0 : index
    %c0_38 = arith.constant 0 : index
    %108 = vector.load %arg8[%c0_36, %c0_37, %c0_38] : memref<1x8x256xf32, #tpu.memory_space<vmem>>, vector<1x8x256xf32>
    %109 = vector.shape_cast %108 : vector<1x8x256xf32> to vector<8x256xf32>
    %110 = vector.shape_cast %107 : vector<8x256xf32> to vector<1x8x256xf32>
    tpu.vector_store %arg8[%c0_36, %c0_37, %c0_38], %110 {strides = array<i32>} : memref<1x8x256xf32, #tpu.memory_space<vmem>>, vector<1x8x256xf32>,
    return
  }
  func.func @transform_0(%arg0: i32) -> (i32, i32, i32) {
    %c0_i32 = arith.constant 0 : i32
    %c0_i32_0 = arith.constant 0 : i32
    %c0_i32_1 = arith.constant 0 : i32
    return %arg0, %c0_i32, %c0_i32_0 : i32, i32, i32
  }
  func.func @transform_1(%arg0: i32) -> (i32, i32) {
    %c0_i32 = arith.constant 0 : i32
    %c0_i32_0 = arith.constant 0 : i32
    %c0_i32_1 = arith.constant 0 : i32
    return %c0_i32, %c0_i32_0 : i32, i32
  }
  func.func @transform_2(%arg0: i32) -> (i32, i32) {
    %c0_i32 = arith.constant 0 : i32
    %c0_i32_0 = arith.constant 0 : i32
    %c0_i32_1 = arith.constant 0 : i32
    return %c0_i32, %c0_i32_0 : i32, i32
  }
  func.func @transform_3(%arg0: i32) -> (i32, i32) {
    %c0_i32 = arith.constant 0 : i32
    %c0_i32_0 = arith.constant 0 : i32
    %c0_i32_1 = arith.constant 0 : i32
    return %c0_i32, %c0_i32_0 : i32, i32
  }
  func.func @transform_4(%arg0: i32) -> (i32, i32) {
    %c0_i32 = arith.constant 0 : i32
    %c0_i32_0 = arith.constant 0 : i32
    %c0_i32_1 = arith.constant 0 : i32
    return %c0_i32, %c0_i32_0 : i32, i32
  }
  func.func @transform_5(%arg0: i32) -> (i32, i32) {
    %c0_i32 = arith.constant 0 : i32
    %c0_i32_0 = arith.constant 0 : i32
    %c0_i32_1 = arith.constant 0 : i32
    return %c0_i32, %c0_i32_0 : i32, i32
  }
  func.func @transform_6(%arg0: i32) -> (i32, i32) {
    %c0_i32 = arith.constant 0 : i32
    %c0_i32_0 = arith.constant 0 : i32
    %c0_i32_1 = arith.constant 0 : i32
    return %c0_i32, %c0_i32_0 : i32, i32
  }
  func.func @transform_7(%arg0: i32) -> (i32, i32, i32) {
    %c0_i32 = arith.constant 0 : i32
    %c0_i32_0 = arith.constant 0 : i32
    %c0_i32_1 = arith.constant 0 : i32
    return %arg0, %c0_i32, %c0_i32_0 : i32, i32, i32
  }
}

</mosaic_0001>

<llo_original>
// kernel: tpu_custom_call.1
$region0: #{tpu_custom_call.1}
  #allocation0 [shape = 'u32[]', space=smem, size = 0x4, offset = 0x4, fixed_abs, tag = 'smem constant byte address 0x4 - core index']
  #allocation1 [shape = 'u32[144,128]{1,0:T(1,128)}', space=vmem, size = 0x12000, scoped, tag = 'internal scratch']
  %s0 = inlined_call_operand.vmem [shape: f32[2,4,256], index: 0, kind: input, shape index: {}]
  %s1 = inlined_call_operand.vmem [shape: bf16[8,36], index: 1, kind: input, shape index: {}]
  %s2 = inlined_call_operand.vmem [shape: f32[8,1], index: 2, kind: input, shape index: {}]
  %s3 = inlined_call_operand.vmem [shape: bf16[8,72], index: 3, kind: input, shape index: {}]
  %s4 = inlined_call_operand.vmem [shape: f32[8,1], index: 4, kind: input, shape index: {}]
  %s5 = inlined_call_operand.vmem [shape: bf16[8,4], index: 5, kind: input, shape index: {}]
  %s6 = inlined_call_operand.vmem [shape: f32[8,1], index: 6, kind: input, shape index: {}]
  %s7 = inlined_call_operand.hbm [shape: f32[2,8,256], index: 7, kind: output, shape index: {}]
  %s8 = sld [smem:[#allocation0]]
  $region61: #{tpu_custom_call.1} parent=0
    _
  %s10 = ssub.s32 1, %s8
  %s11 = scalar_select 0, %s10, %s8
  $region1: #{tpu_custom_call.1} parent=0
    #allocation2 [shape = 'u8[16384]{0}', space=vmem, size = 0x4000, scoped, tag = 'output window, operand 0']
    #allocation3 [shape = 's32[2]{0}', space=sflag, size = 0x8, scoped, tag = 'scoped memory for tpu_custom_call.1']
    %12 = vsyncpa [#allocation3], 0
    %s13 = scalar_lea.sflag [#allocation3], 1
    %14 = vsyncpa %s13, 0
    loop: start=0, step=1, limit=4
    $region2: #{tpu_custom_call.1} parent=1 // loop_pre_header
      _
    $region3: #{tpu_custom_call.1} parent=1 // loop_header
      %s16 = sphi 0, %s20
      %p17 = scmp.ge.s32.totalorder %s16, 4
      %s26 = sphi 0, %s28
      %s29 = sphi 0, %s26
      %s30 = sphi 0, %s29
      %s46 = sphi 0, %s30
      %s50 = sphi 0, %s50
      %s52 = sphi 0, %s50
      %s53 = sphi 0, %s52
      %s67 = sphi 0, %s53
      %s71 = sphi 0, %s71
      %s73 = sphi 0, %s71
      %s74 = sphi 0, %s73
      %s88 = sphi 0, %s74
      %s92 = sphi 0, %s92
      %s94 = sphi 0, %s92
      %s95 = sphi 0, %s94
      %s109 = sphi 0, %s95
      %s113 = sphi 0, %s113
      %s115 = sphi 0, %s113
      %s116 = sphi 0, %s115
      %s130 = sphi 0, %s116
      %s134 = sphi 0, %s134
      %s136 = sphi 0, %s134
      %s137 = sphi 0, %s136
      %s151 = sphi 0, %s137
      %s155 = sphi 0, %s155
      %s157 = sphi 0, %s155
      %s158 = sphi 0, %s157
      %s172 = sphi 0, %s158
      %s178 = sphi 0, %s180
      %s181 = sphi 0, %s178
      %s182 = sphi 0, %s181
      %s198 = sphi 0, %s182
    $region4: #{tpu_custom_call.1} parent=1 // loop_header_branch
      %19 = sbr.rel (%p17) target = $region8
    $region5: #{tpu_custom_call.1} parent=1 // loop_body
      %s21 = ssub.s32 %s16, 1
      %s22 = ssub.s32 %s16, 2
      %s23 = sadd.s32 %s16, 1
      %s24 = ssub.s32 %s16, %s23
      %p25 = scmp.eq.s32.totalorder %s24, 0
      %s27 = sadd.s32 %s26, 1
      %s28 = scalar_select %p25, %s26, %s27
      %p31 = pneg %p25
      %p32 = scmp.eq.s32.totalorder %s16, 1
      %p33 = por %p31, %p32
      %p34 = scmp.ne.s32.totalorder %s26, %s29
      %p35 = scmp.eq.s32.totalorder %s16, 0
      %p36 = por %p34, %p35
      %p37 = scmp.ne.s32.totalorder %s26, %s29
      %p38 = scmp.eq.s32.totalorder %s21, 1
      %p39 = por %p37, %p38
      %p40 = scmp.ne.s32.totalorder %s29, %s30
      %p41 = scmp.eq.s32.totalorder %s21, 0
      %p42 = por %p40, %p41
      %p43 = scmp.ne.s32.totalorder %s29, %s30
      %p44 = scmp.eq.s32.totalorder %s22, 1
      %p45 = por %p43, %p44
      %p47 = scmp.ne.s32.totalorder %s30, %s46
      %p48 = scmp.eq.s32.totalorder %s22, 0
      %p49 = por %p47, %p48
      %s51 = sadd.s32 %s50, 1
      %p54 = scmp.eq.s32.totalorder %s16, 1
      %p55 = scmp.ne.s32.totalorder %s50, %s52
      %p56 = scmp.eq.s32.totalorder %s16, 0
      %p57 = por %p55, %p56
      %p58 = scmp.ne.s32.totalorder %s50, %s52
      %p59 = scmp.eq.s32.totalorder %s21, 1
      %p60 = por %p58, %p59
      %p61 = scmp.ne.s32.totalorder %s52, %s53
      %p62 = scmp.eq.s32.totalorder %s21, 0
      %p63 = por %p61, %p62
      %p64 = scmp.ne.s32.totalorder %s52, %s53
      %p65 = scmp.eq.s32.totalorder %s22, 1
      %p66 = por %p64, %p65
      %p68 = scmp.ne.s32.totalorder %s53, %s67
      %p69 = scmp.eq.s32.totalorder %s22, 0
      %p70 = por %p68, %p69
      %s72 = sadd.s32 %s71, 1
      %p75 = scmp.eq.s32.totalorder %s16, 1
      %p76 = scmp.ne.s32.totalorder %s71, %s73
      %p77 = scmp.eq.s32.totalorder %s16, 0
      %p78 = por %p76, %p77
      %p79 = scmp.ne.s32.totalorder %s71, %s73
      %p80 = scmp.eq.s32.totalorder %s21, 1
      %p81 = por %p79, %p80
      %p82 = scmp.ne.s32.totalorder %s73, %s74
      %p83 = scmp.eq.s32.totalorder %s21, 0
      %p84 = por %p82, %p83
      %p85 = scmp.ne.s32.totalorder %s73, %s74
      %p86 = scmp.eq.s32.totalorder %s22, 1
      %p87 = por %p85, %p86
      %p89 = scmp.ne.s32.totalorder %s74, %s88
      %p90 = scmp.eq.s32.totalorder %s22, 0
      %p91 = por %p89, %p90
      %s93 = sadd.s32 %s92, 1
      %p96 = scmp.eq.s32.totalorder %s16, 1
      %p97 = scmp.ne.s32.totalorder %s92, %s94
      %p98 = scmp.eq.s32.totalorder %s16, 0
      %p99 = por %p97, %p98
      %p100 = scmp.ne.s32.totalorder %s92, %s94
      %p101 = scmp.eq.s32.totalorder %s21, 1
      %p102 = por %p100, %p101
      %p103 = scmp.ne.s32.totalorder %s94, %s95
      %p104 = scmp.eq.s32.totalorder %s21, 0
      %p105 = por %p103, %p104
      %p106 = scmp.ne.s32.totalorder %s94, %s95
      %p107 = scmp.eq.s32.totalorder %s22, 1
      %p108 = por %p106, %p107
      %p110 = scmp.ne.s32.totalorder %s95, %s109
      %p111 = scmp.eq.s32.totalorder %s22, 0
      %p112 = por %p110, %p111
      %s114 = sadd.s32 %s113, 1
      %p117 = scmp.eq.s32.totalorder %s16, 1
      %p118 = scmp.ne.s32.totalorder %s113, %s115
      %p119 = scmp.eq.s32.totalorder %s16, 0
      %p120 = por %p118, %p119
      %p121 = scmp.ne.s32.totalorder %s113, %s115
      %p122 = scmp.eq.s32.totalorder %s21, 1
      %p123 = por %p121, %p122
      %p124 = scmp.ne.s32.totalorder %s115, %s116
      %p125 = scmp.eq.s32.totalorder %s21, 0
      %p126 = por %p124, %p125
      %p127 = scmp.ne.s32.totalorder %s115, %s116
      %p128 = scmp.eq.s32.totalorder %s22, 1
      %p129 = por %p127, %p128
      %p131 = scmp.ne.s32.totalorder %s116, %s130
      %p132 = scmp.eq.s32.totalorder %s22, 0
      %p133 = por %p131, %p132
      %s135 = sadd.s32 %s134, 1
      %p138 = scmp.eq.s32.totalorder %s16, 1
      %p139 = scmp.ne.s32.totalorder %s134, %s136
      %p140 = scmp.eq.s32.totalorder %s16, 0
      %p141 = por %p139, %p140
      %p142 = scmp.ne.s32.totalorder %s134, %s136
      %p143 = scmp.eq.s32.totalorder %s21, 1
      %p144 = por %p142, %p143
      %p145 = scmp.ne.s32.totalorder %s136, %s137
      %p146 = scmp.eq.s32.totalorder %s21, 0
      %p147 = por %p145, %p146
      %p148 = scmp.ne.s32.totalorder %s136, %s137
      %p149 = scmp.eq.s32.totalorder %s22, 1
      %p150 = por %p148, %p149
      %p152 = scmp.ne.s32.totalorder %s137, %s151
      %p153 = scmp.eq.s32.totalorder %s22, 0
      %p154 = por %p152, %p153
      %s156 = sadd.s32 %s155, 1
      %p159 = scmp.eq.s32.totalorder %s16, 1
      %p160 = scmp.ne.s32.totalorder %s155, %s157
      %p161 = scmp.eq.s32.totalorder %s16, 0
      %p162 = por %p160, %p161
      %p163 = scmp.ne.s32.totalorder %s155, %s157
      %p164 = scmp.eq.s32.totalorder %s21, 1
      %p165 = por %p163, %p164
      %p166 = scmp.ne.s32.totalorder %s157, %s158
      %p167 = scmp.eq.s32.totalorder %s21, 0
      %p168 = por %p166, %p167
      %p169 = scmp.ne.s32.totalorder %s157, %s158
      %p170 = scmp.eq.s32.totalorder %s22, 1
      %p171 = por %p169, %p170
      %p173 = scmp.ne.s32.totalorder %s158, %s172
      %p174 = scmp.eq.s32.totalorder %s22, 0
      %p175 = por %p173, %p174
      %s176 = ssub.s32 %s16, %s23
      %p177 = scmp.eq.s32.totalorder %s176, 0
      %s179 = sadd.s32 %s178, 1
      %s180 = scalar_select %p177, %s178, %s179
      %p183 = pneg %p177
      %p184 = scmp.eq.s32.totalorder %s16, 1
      %p185 = por %p183, %p184
      %p186 = scmp.ne.s32.totalorder %s178, %s181
      %p187 = scmp.eq.s32.totalorder %s16, 0
      %p188 = por %p186, %p187
      %p189 = scmp.ne.s32.totalorder %s178, %s181
      %p190 = scmp.eq.s32.totalorder %s21, 1
      %p191 = por %p189, %p190
      %p192 = scmp.ne.s32.totalorder %s181, %s182
      %p193 = scmp.eq.s32.totalorder %s21, 0
      %p194 = por %p192, %p193
      %p195 = scmp.ne.s32.totalorder %s181, %s182
      %p196 = scmp.eq.s32.totalorder %s22, 1
      %p197 = por %p195, %p196
      %p199 = scmp.ne.s32.totalorder %s182, %s198
      %p200 = scmp.eq.s32.totalorder %s22, 0
      %p201 = por %p199, %p200
      %p202 = scmp.le.s32.totalorder 1, %s16
      %p203 = scmp.lt.s32.totalorder %s16, 3
      %p204 = pnand %p202, %p203
      %p205 = pneg %p204
      // Predicated region
      $region9: #{tpu_custom_call.1} parent=5 // pred_check
        _
      $region10: #{tpu_custom_call.1} parent=5 // pred_check_branch
        %207 = sbr.rel (%p204) target = $region12
      $region11: #{tpu_custom_call.1} parent=5 // pred_region
        %s208 = ssub.s32 %s16, 1
        // Predicated region
        $region13: #{tpu_custom_call.1} parent=11 // pred_check
          %p209 = pneg %p63
        $region14: #{tpu_custom_call.1} parent=11 // pred_check_branch
          %211 = sbr.rel (%p209) target = $region16
        $region15: #{tpu_custom_call.1} parent=11 // pred_region
          _
        $region16: #{tpu_custom_call.1} parent=11 // pred_fallthru
          _
        // Predicated region
        $region17: #{tpu_custom_call.1} parent=11 // pred_check
          %p212 = pneg %p84
        $region18: #{tpu_custom_call.1} parent=11 // pred_check_branch
          %214 = sbr.rel (%p212) target = $region20
        $region19: #{tpu_custom_call.1} parent=11 // pred_region
          _
        $region20: #{tpu_custom_call.1} parent=11 // pred_fallthru
          _
        // Predicated region
        $region21: #{tpu_custom_call.1} parent=11 // pred_check
          %p215 = pneg %p105
        $region22: #{tpu_custom_call.1} parent=11 // pred_check_branch
          %217 = sbr.rel (%p215) target = $region24
        $region23: #{tpu_custom_call.1} parent=11 // pred_region
          _
        $region24: #{tpu_custom_call.1} parent=11 // pred_fallthru
          _
        // Predicated region
        $region25: #{tpu_custom_call.1} parent=11 // pred_check
          %p218 = pneg %p126
        $region26: #{tpu_custom_call.1} parent=11 // pred_check_branch
          %220 = sbr.rel (%p218) target = $region28
        $region27: #{tpu_custom_call.1} parent=11 // pred_region
          _
        $region28: #{tpu_custom_call.1} parent=11 // pred_fallthru
          _
        // Predicated region
        $region29: #{tpu_custom_call.1} parent=11 // pred_check
          %p221 = pneg %p147
        $region30: #{tpu_custom_call.1} parent=11 // pred_check_branch
          %223 = sbr.rel (%p221) target = $region32
        $region31: #{tpu_custom_call.1} parent=11 // pred_region
          _
        $region32: #{tpu_custom_call.1} parent=11 // pred_fallthru
          _
        // Predicated region
        $region33: #{tpu_custom_call.1} parent=11 // pred_check
          %p224 = pneg %p168
        $region34: #{tpu_custom_call.1} parent=11 // pred_check_branch
          %226 = sbr.rel (%p224) target = $region36
        $region35: #{tpu_custom_call.1} parent=11 // pred_region
          _
        $region36: #{tpu_custom_call.1} parent=11 // pred_fallthru
          _
      $region12: #{tpu_custom_call.1} parent=5 // pred_fallthru
        _
      %p227 = scmp.lt.s32.totalorder %s16, 2
      // Predicated region
      $region37: #{tpu_custom_call.1} parent=5 // pred_check
        %p228 = pneg %p227
      $region38: #{tpu_custom_call.1} parent=5 // pred_check_branch
        %230 = sbr.rel (%p228) target = $region40
      $region39: #{tpu_custom_call.1} parent=5 // pred_region
        // Predicated region
        $region41: #{tpu_custom_call.1} parent=39 // pred_check
          %p231 = pneg %p36
        $region42: #{tpu_custom_call.1} parent=39 // pred_check_branch
          %233 = sbr.rel (%p231) target = $region44
        $region43: #{tpu_custom_call.1} parent=39 // pred_region
          %p234 = scmp.lt.s32.totalorder %s16, 1
          %s235 = scalar_select %p234, %s16, 1
          %s236 = smul.addr %s235, 2
          %s237 = smul.addr %s236, 4
          %s238 = scalar_lea.vmem %s0, %s237
        $region44: #{tpu_custom_call.1} parent=39 // pred_fallthru
          _
      $region40: #{tpu_custom_call.1} parent=5 // pred_fallthru
        _
      %p239 = scmp.le.s32.totalorder 1, %s16
      %p240 = scmp.lt.s32.totalorder %s16, 3
      %p241 = pnand %p239, %p240
      %p242 = pneg %p241
      // Predicated region
      $region45: #{tpu_custom_call.1} parent=5 // pred_check
        _
      $region46: #{tpu_custom_call.1} parent=5 // pred_check_branch
        %244 = sbr.rel (%p241) target = $region48
      $region47: #{tpu_custom_call.1} parent=5 // pred_region
        %s245 = ssub.s32 %s16, 1
        %p246 = scmp.lt.s32.totalorder %s21, 1
        %s247 = scalar_select %p246, %s21, 1
        %s248 = smul.addr %s247, 2
        %s249 = smul.addr %s248, 4
        %s250 = scalar_lea.vmem %s0, %s249
        %p251 = pneg %p42
        %p252 = pneg %p39
        %p253 = pneg %p63
        %p254 = pneg %p60
        %p255 = pneg %p84
        %p256 = pneg %p81
        %p257 = pneg %p105
        %p258 = pneg %p102
        %p259 = pneg %p126
        %p260 = pneg %p123
        %p261 = pneg %p147
        %p262 = pneg %p144
        %p263 = pneg %p168
        %p264 = pneg %p165
        %p265 = pneg %p194
        %p266 = pneg %p191
        %s267 = sand.u32 %s181, 1
        %s268 = scalar_lea.sflag [#allocation3], %s267
        %s269 = sand.u32 %s181, 1
        %s270 = smul.addr %s269, 16
        %s271 = scalar_lea.vmem [#allocation2], %s270
        %p272 = scmp.lt.s32.totalorder %s21, 1
        %s273 = scalar_select %p272, %s21, 1
        %s274 = smul.addr %s273, 2
        %s275 = smul.addr %s274, 4
        %s276 = scalar_lea.vmem %s0, %s275
        %v278 = vlaneseq
        %v279 = vand.u32 %v278, 127
        %v280 = vadd.s32 %v279, 128
        %vm281 = vcmp.lt.s32.totalorder %v279, 0
        %v282 = vsub.s32 0, %v279
        %v283 = vsel %vm281, %v282, %v279
        %v284 = vshrl.u32 %v283, 4
        %v285 = vand.u32 %v283, 15
        %v286 = vsub.s32 0, %v285
        %v287 = vsel %vm281, %v286, %v285
        %vm288 = vcmp.lt.s32.totalorder %v280, 0
        %v289 = vsub.s32 0, %v280
        %v290 = vsel %vm288, %v289, %v280
        %v291 = vshrl.u32 %v290, 4
        %v292 = vand.u32 %v290, 15
        %v293 = vsub.s32 0, %v292
        %v294 = vsel %vm288, %v293, %v292
        %vm295 = vcmp.ne.s32.totalorder %v287, 0
        %vm296 = vcmp.ne.s32.totalorder %v294, 0
        %vm297 = vcmp.lt.s32.totalorder %v287, 0
        %vm298 = vcmp.lt.s32.totalorder %v294, 0
        %vm299 = vmand %vm297, %vm295
        %vm300 = vmand %vm298, %vm296
        %v301 = vadd.s32 %v287, 16
        %v302 = vadd.s32 %v294, 16
        %v303 = vsel %vm299, %v301, %v287
        %v304 = vsel %vm300, %v302, %v294
        %vm305 = vcmp.ne.s32.totalorder %v303, 0
        %vm306 = vcmp.ne.s32.totalorder %v304, 0
        %v307 = vsel %vm305, 1, 0
        %v308 = vsel %vm306, 1, 0
        %v309 = vcvt.s32.f32 %v307
        %v310 = vcvt.s32.f32 %v308
        %vm311 = vcmp.ne.s32.totalorder %v303, 15
        %vm312 = vcmp.ne.s32.totalorder %v304, 15
        %v313 = vsel %vm311, 1, 0
        %v314 = vsel %vm312, 1, 0
        %v315 = vcvt.s32.f32 %v313
        %v316 = vcvt.s32.f32 %v314
        %vm317 = vcmp.ge.s32.totalorder %v279, 16
        %vm318 = vcmp.ge.s32.totalorder %v280, 16
        %v319 = vsel %vm317, 1, 0
        %v320 = vsel %vm318, 1, 0
        %v321 = vcvt.s32.f32 %v319
        %v322 = vcvt.s32.f32 %v320
        %vm323 = vcmp.lt.s32.totalorder %v279, 240
        %vm324 = vcmp.lt.s32.totalorder %v280, 240
        %v325 = vsel %vm323, 1, 0
        %v326 = vsel %vm324, 1, 0
        %v327 = vcvt.s32.f32 %v325
        %v328 = vcvt.s32.f32 %v326
        %v329 = vld [vmem:[%s276] sm:$0xff]
        %v331 = vcombine.high %v329, %v329
        %333 = vrot.lane.b32.xlu0 %v329, 1
        %v334 = vpop.permute.xlu0 %333
        %335 = vrot.lane.b32.xlu0 %v331, 1
        %v336 = vpop.permute.xlu0 %335
        %vm337 = vcmp.lt.s32.totalorder %v279, 1
        %v338 = vsel %vm337, %v334, %v336
        %v339 = vsel %vm337, %v336, %v334
        %v340 = vmul.f32 %v339, %v309
        %v341 = vmul.f32 %v338, %v310
        %342 = vrot.lane.b32.xlu0 %v329, 127
        %v343 = vpop.permute.xlu0 %342
        %344 = vrot.lane.b32.xlu0 %v331, 127
        %v345 = vpop.permute.xlu0 %344
        %vm346 = vcmp.lt.s32.totalorder %v279, 127
        %v347 = vsel %vm346, %v343, %v345
        %v348 = vsel %vm346, %v345, %v343
        %v349 = vmul.f32 %v347, %v315
        %v350 = vmul.f32 %v348, %v316
        %v351 = vcombine.low %v329, %v329
        %vm353 = vcmask 1043456
        %v354 = vsel %vm353, %v340, %v351
        %v355 = vsel %vm353, %v341, %v329
        %356 = vrot.lane.b32.xlu0 %v354, 16
        %v357 = vpop.permute.xlu0 %356
        %358 = vrot.lane.b32.xlu0 %v349, 16
        %v359 = vpop.permute.xlu0 %358
        %360 = vrot.lane.b32.xlu0 %v355, 16
        %v361 = vpop.permute.xlu0 %360
        %362 = vrot.lane.b32.xlu0 %v350, 16
        %v363 = vpop.permute.xlu0 %362
        %vm364 = vcmp.lt.s32.totalorder %v279, 16
        %v365 = vsel %vm364, %v357, %v361
        %v366 = vsel %vm364, %v359, %v363
        %v367 = vsel %vm364, %v361, %v357
        %v368 = vsel %vm364, %v363, %v359
        %v369 = vmul.f32 %v367, %v321
        %v370 = vmul.f32 %v365, %v322
        %v371 = vmul.f32 %v368, %v321
        %v372 = vmul.f32 %v366, %v322
        %373 = vrot.lane.b32.xlu0 %v354, 112
        %v374 = vpop.permute.xlu0 %373
        %375 = vrot.lane.b32.xlu0 %v349, 112
        %v376 = vpop.permute.xlu0 %375
        %377 = vrot.lane.b32.xlu0 %v355, 112
        %v378 = vpop.permute.xlu0 %377
        %379 = vrot.lane.b32.xlu0 %v350, 112
        %v380 = vpop.permute.xlu0 %379
        %vm381 = vcmp.lt.s32.totalorder %v279, 112
        %v382 = vsel %vm381, %v374, %v378
        %v383 = vsel %vm381, %v376, %v380
        %v384 = vsel %vm381, %v378, %v374
        %v385 = vsel %vm381, %v380, %v376
        %v386 = vmul.f32 %v382, %v327
        %v387 = vmul.f32 %v384, %v328
        %v388 = vmul.f32 %v383, %v327
        %v389 = vmul.f32 %v385, %v328
        %v394 = vrot.slane %v354, 4
        %v395 = vrot.slane %v355, 4
        %v396 = vrot.slane %v349, 4
        %v397 = vsel %vm353, %v394, %v396
        %v398 = vrot.slane %v350, 4
        %v399 = vsel %vm353, %v395, %v398
        %v404 = vsel %vm353, %v371, %v394
        %v405 = vsel %vm353, %v372, %v395
        %v406 = vld [vmem:[%s1] sm:$0xf]
        %v407 = vpack.c.bf16 %v404, %v369
        %v408 = vpack.c.bf16 %v405, %v370
        %v409 = vpack.c.bf16 %v386, %v397
        %v410 = vpack.c.bf16 %v387, %v399
        %v411 = vpack.c.bf16 %v388, %v388
        %v412 = vpack.c.bf16 %v389, %v389
        %v413 = vld [vmem:[%s2] sm:$0xff]
        %415 = vset.pattern.permute.xlu0 0
        %416 = vperm.xlu0 %415, %v413
        %v417 = vpop.permute.xlu0 %416
        %vm419 = vcmask 293888
        %v421 = vsel %vm419, %v406, 0
        %vm423 = vcmask 1041408
        %v425 = vsel %vm423, %v411, 0
        %v428 = vsel %vm423, %v412, 0
        %430 = vmatprep.subr.bf16.mxu0 0
        %431 = vmatpush1.bf16.msra.mxu0 0
        %432 = vmatprep.subr.bf16.mxu0 0
        %433 = vmatpush1.bf16.msra.mxu0 0
        %434 = vmatprep.subr.bf16.mxu0 0
        %435 = vmatpush1.bf16.msra.mxu0 0
        %436 = vmatprep.subr.bf16.mxu0 0
        %437 = vmatpush1.bf16.msra.mxu0 0
        %438 = vmatprep.subr.bf16.mxu0 0
        %439 = vmatpush1.bf16.msra.mxu0 0
        %440 = vmatprep.subr.bf16.mxu0 %v428
        %441 = vmatpush1.bf16.msra.mxu0 %v425
        %442 = vmatprep.subr.bf16.mxu0 %v410
        %443 = vmatpush1.bf16.msra.mxu0 %v409
        %444 = vmatprep.subr.bf16.mxu0 %v408
        %445 = vmatpush1.bf16.msra.mxu0 %v407
        %446 = vmatprep.subr.bf16.mxu0 0
        %447 = vmatpush2.bf16.msra.mxu0 0
        %448 = vmatprep.subr.bf16.mxu0 0
        %449 = vmatpush2.bf16.msra.mxu0 0
        %450 = vmatprep.subr.bf16.mxu0 0
        %451 = vmatpush2.bf16.msra.mxu0 0
        %452 = vmatprep.subr.bf16.mxu0 0
        %453 = vmatpush2.bf16.msra.mxu0 0
        %454 = vmatprep.subr.bf16.mxu0 0
        %455 = vmatpush2.bf16.msra.mxu0 0
        %456 = vmatprep.subr.bf16.mxu0 0
        %457 = vmatpush2.bf16.msra.mxu0 0
        %458 = vmatprep.subr.bf16.mxu0 0
        %459 = vmatpush2.bf16.msra.mxu0 0
        %460 = vmatprep.subr.bf16.mxu0 0
        %461 = vmatpush2.bf16.msra.mxu0 0
        %462 = vmatprep.mubr.bf16.mxu0 0
        %463 = vmatmul.mubr.bf16.gmra.mxu0 %v421
        %v464 = vpop.f32.mrf.mxu0
        %v465 = vadd.f32 %v417, %v464
        %v466 = vpop.f32.mrf.mxu0
        %v467 = vadd.f32 %v417, %v466
        %v468 = vpop.f32.mrf.mxu0
        %v469 = vpop.f32.mrf.mxu0
        %470 = vdwg.mxu0
        %v471 = vmul.f32 %v465, 0.5
        %v472 = vmul.f32 %v467, 0.5
        %v473 = vmul.f32 %v465, %v465
        %v474 = vmul.f32 %v467, %v467
        %v475 = vmul.f32 %v473, %v465
        %v476 = vmul.f32 %v474, %v467
        %v477 = vmul.f32 %v475, 0.044715
        %v478 = vmul.f32 %v476, 0.044715
        %v479 = vadd.f32 %v465, %v477
        %v480 = vadd.f32 %v467, %v478
        %v481 = vmul.f32 %v479, 0.7978846
        %v482 = vmul.f32 %v480, 0.7978846
        %v483 = vtanh.pop %v481
        %v484 = vtanh.pop %v482
        %v485 = vadd.f32 %v483, 1.0
        %v486 = vadd.f32 %v484, 1.0
        %v487 = vmul.f32 %v471, %v485
        %v488 = vmul.f32 %v472, %v486
        %489 = vrot.lane.b32.xlu0 %v487, 1
        %v490 = vpop.permute.xlu0 %489
        %491 = vrot.lane.b32.xlu0 %v488, 1
        %v492 = vpop.permute.xlu0 %491
        %v493 = vsel %vm337, %v490, %v492
        %v494 = vsel %vm337, %v492, %v490
        %v495 = vmul.f32 %v494, %v309
        %v496 = vmul.f32 %v493, %v310
        %497 = vrot.lane.b32.xlu0 %v487, 127
        %v498 = vpop.permute.xlu0 %497
        %499 = vrot.lane.b32.xlu0 %v488, 127
        %v500 = vpop.permute.xlu0 %499
        %v501 = vsel %vm346, %v498, %v500
        %v502 = vsel %vm346, %v500, %v498
        %v503 = vmul.f32 %v501, %v315
        %v504 = vmul.f32 %v502, %v316
        %505 = vrot.lane.b32.xlu0 %v495, 16
        %v506 = vpop.permute.xlu0 %505
        %507 = vrot.lane.b32.xlu0 %v487, 16
        %v508 = vpop.permute.xlu0 %507
        %509 = vrot.lane.b32.xlu0 %v503, 16
        %v510 = vpop.permute.xlu0 %509
        %511 = vrot.lane.b32.xlu0 %v496, 16
        %v512 = vpop.permute.xlu0 %511
        %513 = vrot.lane.b32.xlu0 %v488, 16
        %v514 = vpop.permute.xlu0 %513
        %515 = vrot.lane.b32.xlu0 %v504, 16
        %v516 = vpop.permute.xlu0 %515
        %v517 = vsel %vm364, %v506, %v512
        %v518 = vsel %vm364, %v508, %v514
        %v519 = vsel %vm364, %v510, %v516
        %v520 = vsel %vm364, %v512, %v506
        %v521 = vsel %vm364, %v514, %v508
        %v522 = vsel %vm364, %v516, %v510
        %v523 = vmul.f32 %v520, %v321
        %v524 = vmul.f32 %v517, %v322
        %v525 = vmul.f32 %v521, %v321
        %v526 = vmul.f32 %v518, %v322
        %v527 = vmul.f32 %v522, %v321
        %v528 = vmul.f32 %v519, %v322
        %529 = vrot.lane.b32.xlu0 %v495, 112
        %v530 = vpop.permute.xlu0 %529
        %531 = vrot.lane.b32.xlu0 %v487, 112
        %v532 = vpop.permute.xlu0 %531
        %533 = vrot.lane.b32.xlu0 %v503, 112
        %v534 = vpop.permute.xlu0 %533
        %535 = vrot.lane.b32.xlu0 %v496, 112
        %v536 = vpop.permute.xlu0 %535
        %537 = vrot.lane.b32.xlu0 %v488, 112
        %v538 = vpop.permute.xlu0 %537
        %539 = vrot.lane.b32.xlu0 %v504, 112
        %v540 = vpop.permute.xlu0 %539
        %v541 = vsel %vm381, %v530, %v536
        %v542 = vsel %vm381, %v532, %v538
        %v543 = vsel %vm381, %v534, %v540
        %v544 = vsel %vm381, %v536, %v530
        %v545 = vsel %vm381, %v538, %v532
        %v546 = vsel %vm381, %v540, %v534
        %v547 = vmul.f32 %v541, %v327
        %v548 = vmul.f32 %v544, %v328
        %v549 = vmul.f32 %v542, %v327
        %v550 = vmul.f32 %v545, %v328
        %v551 = vmul.f32 %v543, %v327
        %v552 = vmul.f32 %v546, %v328
        %v553 = vld [vmem:[%s3] sm:$0xf]
        %v554 = vpack.c.bf16 %v525, %v523
        %v555 = vpack.c.bf16 %v526, %v524
        %v556 = vpack.c.bf16 %v495, %v527
        %v557 = vpack.c.bf16 %v496, %v528
        %v558 = vpack.c.bf16 %v503, %v487
        %v559 = vpack.c.bf16 %v504, %v488
        %v560 = vpack.c.bf16 %v549, %v547
        %v561 = vpack.c.bf16 %v550, %v548
        %v562 = vpack.c.bf16 %v551, %v551
        %v563 = vpack.c.bf16 %v552, %v552
        %v564 = vld [vmem:[%s4] sm:$0xff]
        %566 = vset.pattern.permute.xlu0 0
        %567 = vperm.xlu0 %566, %v564
        %v568 = vpop.permute.xlu0 %567
        %vm570 = vcmask 588800
        %v572 = vsel %vm570, %v553, 0
        %v575 = vsel %vm353, %v562, 0
        %v578 = vsel %vm353, %v563, 0
        %580 = vmatprep.subr.bf16.mxu0 0
        %581 = vmatpush1.bf16.msra.mxu0 0
        %582 = vmatprep.subr.bf16.mxu0 0
        %583 = vmatpush1.bf16.msra.mxu0 0
        %584 = vmatprep.subr.bf16.mxu0 0
        %585 = vmatpush1.bf16.msra.mxu0 0
        %586 = vmatprep.subr.bf16.mxu0 %v578
        %587 = vmatpush1.bf16.msra.mxu0 %v575
        %588 = vmatprep.subr.bf16.mxu0 %v561
        %589 = vmatpush1.bf16.msra.mxu0 %v560
        %590 = vmatprep.subr.bf16.mxu0 %v559
        %591 = vmatpush1.bf16.msra.mxu0 %v558
        %592 = vmatprep.subr.bf16.mxu0 %v557
        %593 = vmatpush1.bf16.msra.mxu0 %v556
        %594 = vmatprep.subr.bf16.mxu0 %v555
        %595 = vmatpush1.bf16.msra.mxu0 %v554
        %596 = vmatprep.subr.bf16.mxu0 0
        %597 = vmatpush2.bf16.msra.mxu0 0
        %598 = vmatprep.subr.bf16.mxu0 0
        %599 = vmatpush2.bf16.msra.mxu0 0
        %600 = vmatprep.subr.bf16.mxu0 0
        %601 = vmatpush2.bf16.msra.mxu0 0
        %602 = vmatprep.subr.bf16.mxu0 0
        %603 = vmatpush2.bf16.msra.mxu0 0
        %604 = vmatprep.subr.bf16.mxu0 0
        %605 = vmatpush2.bf16.msra.mxu0 0
        %606 = vmatprep.subr.bf16.mxu0 0
        %607 = vmatpush2.bf16.msra.mxu0 0
        %608 = vmatprep.subr.bf16.mxu0 0
        %609 = vmatpush2.bf16.msra.mxu0 0
        %610 = vmatprep.subr.bf16.mxu0 0
        %611 = vmatpush2.bf16.msra.mxu0 0
        %612 = vmatprep.mubr.bf16.mxu0 0
        %613 = vmatmul.mubr.bf16.gmra.mxu0 %v572
        %v614 = vpop.f32.mrf.mxu0
        %v615 = vadd.f32 %v568, %v614
        %v616 = vpop.f32.mrf.mxu0
        %v617 = vadd.f32 %v568, %v616
        %v618 = vpop.f32.mrf.mxu0
        %v619 = vpop.f32.mrf.mxu0
        %620 = vdwg.mxu0
        %v621 = vld [vmem:[%s5] sm:$0xf]
        %v622 = vpack.c.bf16 %v329, %v329
        %v623 = vpack.c.bf16 %v331, %v331
        %v624 = vld [vmem:[%s6] sm:$0xff]
        %626 = vset.pattern.permute.xlu0 0
        %627 = vperm.xlu0 %626, %v624
        %v628 = vpop.permute.xlu0 %627
        %vm630 = vcmask 31744
        %v632 = vsel %vm630, %v621, 0
        %v635 = vsel %vm423, %v622, 0
        %v638 = vsel %vm423, %v623, 0
        %640 = vmatprep.subr.bf16.mxu0 0
        %641 = vmatpush1.bf16.msra.mxu0 0
        %642 = vmatprep.subr.bf16.mxu0 0
        %643 = vmatpush1.bf16.msra.mxu0 0
        %644 = vmatprep.subr.bf16.mxu0 0
        %645 = vmatpush1.bf16.msra.mxu0 0
        %646 = vmatprep.subr.bf16.mxu0 0
        %647 = vmatpush1.bf16.msra.mxu0 0
        %648 = vmatprep.subr.bf16.mxu0 0
        %649 = vmatpush1.bf16.msra.mxu0 0
        %650 = vmatprep.subr.bf16.mxu0 0
        %651 = vmatpush1.bf16.msra.mxu0 0
        %652 = vmatprep.subr.bf16.mxu0 0
        %653 = vmatpush1.bf16.msra.mxu0 0
        %654 = vmatprep.subr.bf16.mxu0 %v638
        %655 = vmatpush1.bf16.msra.mxu0 %v635
        %656 = vmatprep.subr.bf16.mxu0 0
        %657 = vmatpush2.bf16.msra.mxu0 0
        %658 = vmatprep.subr.bf16.mxu0 0
        %659 = vmatpush2.bf16.msra.mxu0 0
        %660 = vmatprep.subr.bf16.mxu0 0
        %661 = vmatpush2.bf16.msra.mxu0 0
        %662 = vmatprep.subr.bf16.mxu0 0
        %663 = vmatpush2.bf16.msra.mxu0 0
        %664 = vmatprep.subr.bf16.mxu0 0
        %665 = vmatpush2.bf16.msra.mxu0 0
        %666 = vmatprep.subr.bf16.mxu0 0
        %667 = vmatpush2.bf16.msra.mxu0 0
        %668 = vmatprep.subr.bf16.mxu0 0
        %669 = vmatpush2.bf16.msra.mxu0 0
        %670 = vmatprep.subr.bf16.mxu0 0
        %671 = vmatpush2.bf16.msra.mxu0 0
        %672 = vmatprep.mubr.bf16.mxu0 0
        %673 = vmatmul.mubr.bf16.gmra.mxu0 %v632
        %v674 = vpop.f32.mrf.mxu0
        %v675 = vadd.f32 %v628, %v674
        %v676 = vpop.f32.mrf.mxu0
        %v677 = vadd.f32 %v628, %v676
        %v678 = vpop.f32.mrf.mxu0
        %v679 = vpop.f32.mrf.mxu0
        %680 = vdwg.mxu0
        %v681 = vadd.f32 %v615, %v675
        %v682 = vadd.f32 %v617, %v677
        %v683 = vmul.f32 %v681, 0.5
        %v684 = vmul.f32 %v682, 0.5
        %v685 = vmul.f32 %v681, %v681
        %v686 = vmul.f32 %v682, %v682
        %v687 = vmul.f32 %v685, %v681
        %v688 = vmul.f32 %v686, %v682
        %v689 = vmul.f32 %v687, 0.044715
        %v690 = vmul.f32 %v688, 0.044715
        %v691 = vadd.f32 %v681, %v689
        %v692 = vadd.f32 %v682, %v690
        %v693 = vmul.f32 %v691, 0.7978846
        %v694 = vmul.f32 %v692, 0.7978846
        %v695 = vtanh.pop %v693
        %v696 = vtanh.pop %v694
        %v697 = vadd.f32 %v695, 1.0
        %v698 = vadd.f32 %v696, 1.0
        %v699 = vmul.f32 %v683, %v697
        %v700 = vmul.f32 %v684, %v698
        %701 = vst [vmem:[%s271] sm:$0xff] %v699
        %702 = vst [vmem:[%s271 + $0x8] sm:$0xff] %v700
        %s703 = sand.u32 %s181, 1
        %s704 = scalar_lea.sflag [#allocation3], %s703
        %s705 = sand.u32 %s181, 1
        %s706 = smul.addr %s705, 16
        %s707 = scalar_lea.vmem [#allocation2], %s706
        // Predicated region
        $region49: #{tpu_custom_call.1} parent=47 // pred_check
          %p708 = pneg %p191
        $region50: #{tpu_custom_call.1} parent=47 // pred_check_branch
          %710 = sbr.rel (%p708) target = $region52
        $region51: #{tpu_custom_call.1} parent=47 // pred_region
          %s712 = ssub.s32 256, 256
          %713 = vsyncadd %s704, %s712
          %s714 = smul.addr %s21, 2
          %s715 = smul.addr %s714, 128
          %s716 = scalar_lea.hbm %s7, %s715
          %s718 = sshll.u32 %s707, 4
          %s719 = int_to_ptr.vmem [resolvable:$true] %s718
          %721 = dma.vmem_to_hbm [thread:$0]  %s719, 256, %s716, %s704
        $region52: #{tpu_custom_call.1} parent=47 // pred_fallthru
          _
      $region48: #{tpu_custom_call.1} parent=5 // pred_fallthru
        _
      %p722 = scmp.le.s32.totalorder 2, %s16
      // Predicated region
      $region53: #{tpu_custom_call.1} parent=5 // pred_check
        %p723 = pneg %p722
      $region54: #{tpu_custom_call.1} parent=5 // pred_check_branch
        %725 = sbr.rel (%p723) target = $region56
      $region55: #{tpu_custom_call.1} parent=5 // pred_region
        %s726 = ssub.s32 %s16, 2
        // Predicated region
        $region57: #{tpu_custom_call.1} parent=55 // pred_check
          %p727 = pneg %p197
        $region58: #{tpu_custom_call.1} parent=55 // pred_check_branch
          %729 = sbr.rel (%p727) target = $region60
        $region59: #{tpu_custom_call.1} parent=55 // pred_region
          %s730 = sand.u32 %s182, 1
          %s731 = scalar_lea.sflag [#allocation3], %s730
          %s732 = sand.u32 %s182, 1
          %s733 = smul.addr %s732, 16
          %s734 = scalar_lea.vmem [#allocation2], %s733
          %735 = dma.done %s731, 256
        $region60: #{tpu_custom_call.1} parent=55 // pred_fallthru
          _
      $region56: #{tpu_custom_call.1} parent=5 // pred_fallthru
        _
    $region6: #{tpu_custom_call.1} parent=1 // loop_footer
      %s20 = sadd.s32 1, %s16
    $region7: #{tpu_custom_call.1} parent=1 // loop_footer_branch
      %15 = sbr.rel target = $region3
    $region8: #{tpu_custom_call.1} parent=1 // loop_exit
      _
    %736 = vsyncpa [#allocation3], 1
    %s737 = scalar_lea.sflag [#allocation3], 1
    %738 = vsyncpa %s737, 1

</llo_original>
